<compile_context>
chip_gen: v6e
topology: v6e:2x2x1
jax: 0.10.0
libtpu: 0.0.40
codegen_flags: <defaults>
</compile_context>

<pallas_src>
import jax
import jax.numpy as jnp
from jax.experimental import pallas as pl
from jax.experimental.pallas import tpu as pltpu

# ---- small synthetic shapes consistent with the module's __init__ ----
B = 4                    # batch of image features
VIS_DIM = 32             # clip_model.visual.output_dim
HID = VIS_DIM // 16      # meta_net hidden dim = 2
CTX_DIM = 128            # clip_model.ln_final.weight.shape[0] (lane-aligned toy size)
N_CTX = 4                # number of context tokens
N_CLS = 3                # number of ID class names
N_TKN = 8                # total prompt length (1 prefix + N_CTX + suffix)
SUF = N_TKN - 1 - N_CTX  # suffix token count
FLAT = N_TKN * CTX_DIM   # lane-dense flattened prompt row (multiple of 128)
ROWS = B * N_CLS         # folded leading dim of the output slab
PW = VIS_DIM + CTX_DIM   # packed-parameter buffer width


def prompt_learner_kernel(im_ref, mp_ref, presuf_ref, out_ref):
    # Packed-parameter layout (mp_ref, (8, VIS_DIM+CTX_DIM)):
    #   rows 0..HID-1        : [ w1[j, :VIS_DIM] | w2[j, :CTX_DIM] ]
    #   row  HID             : [ b1 (first HID lanes)   | b2        ]
    #   rows HID+1..HID+N_CTX: [ zeros                   | ctx[t]    ]
    im = im_ref[...]                                                   # (B, VIS_DIM)

    # ---- meta_net: Linear(vis,HID) -> ReLU -> Linear(HID,CTX_DIM) on VPU/XLU ----
    bias = mp_ref[HID:HID + 1, VIS_DIM:VIS_DIM + CTX_DIM]              # b2, (1, CTX_DIM)
    for j in range(HID):                                               # static, HID == 2
        w1j = mp_ref[j:j + 1, 0:VIS_DIM]                               # (1, VIS_DIM)
        b1j = mp_ref[HID:HID + 1, j:j + 1]                             # (1, 1)
        w2j = mp_ref[j:j + 1, VIS_DIM:VIS_DIM + CTX_DIM]               # (1, CTX_DIM)
        hj = jnp.sum(im * w1j, axis=-1, keepdims=True)                 # (B, 1) lane-reduce
        hj = jnp.maximum(hj + b1j, 0.0)                                # ReLU
        bias = bias + hj * w2j                                         # (B, CTX_DIM)

    # ---- construct_prompts: direct stores into 128-aligned lane slices of out_ref ----
    # Row layout: row = b * N_CLS + c  (batch-major, class-minor).
    pre = presuf_ref[:, 0:CTX_DIM]                                     # (N_CLS, CTX_DIM)
    suf = presuf_ref[:, CTX_DIM:]                                      # (N_CLS, SUF*CTX_DIM)

    # prefix tokens: batch-invariant, repeat class rows B times along sublanes
    pre_rows = jnp.broadcast_to(pre[None, :, :], (B, N_CLS, CTX_DIM)).reshape(ROWS, CTX_DIM)
    out_ref[:, 0:CTX_DIM] = pre_rows.astype(out_ref.dtype)

    # ctx tokens: bias added per 128-lane token chunk, broadcast over classes
    for t in range(N_CTX):                                             # static, N_CTX == 4
        ctx_t = mp_ref[HID + 1 + t:HID + 2 + t, VIS_DIM:VIS_DIM + CTX_DIM]  # (1, CTX_DIM)
        shifted = ctx_t + bias                                         # (B, CTX_DIM)
        rows = jnp.broadcast_to(shifted[:, None, :],
                                (B, N_CLS, CTX_DIM)).reshape(ROWS, CTX_DIM)
        off = (1 + t) * CTX_DIM
        out_ref[:, off:off + CTX_DIM] = rows.astype(out_ref.dtype)

    # suffix tokens: batch-invariant
    suf_rows = jnp.broadcast_to(suf[None, :, :],
                                (B, N_CLS, SUF * CTX_DIM)).reshape(ROWS, SUF * CTX_DIM)
    out_ref[:, (1 + N_CTX) * CTX_DIM:] = suf_rows.astype(out_ref.dtype)


def prompt_learner_forward(im_features, w1, b1, w2, b2, ctx,
                           token_prefix, token_suffix):
    """Forward pass of PromptLearner (ID branch).

    im_features:  (B, VIS_DIM)
    w1:           (HID, VIS_DIM)   -- meta_net.linear1.weight (PyTorch (out, in) layout)
    b1:           (1, HID)
    w2:           (HID, CTX_DIM)   -- meta_net.linear2.weight.T ((in, out) layout)
    b2:           (1, CTX_DIM)
    ctx:          (N_CTX, CTX_DIM)
    token_prefix: (N_CLS, 1, CTX_DIM)
    token_suffix: (N_CLS, SUF, CTX_DIM)
    Returns prompts_id: (B, N_CLS, N_TKN, CTX_DIM)
    """
    # ---- XLA-side layout plumbing (one-time packing of tiny parameters) ----
    # Single (8, VIS_DIM+CTX_DIM) param slab: one DMA, one padded sublane tile in VMEM.
    mp = jnp.zeros((8, PW), jnp.float32)
    mp = mp.at[0:HID, 0:VIS_DIM].set(w1)
    mp = mp.at[0:HID, VIS_DIM:].set(w2)
    mp = mp.at[HID, 0:HID].set(b1.reshape(HID))
    mp = mp.at[HID, VIS_DIM:].set(b2.reshape(CTX_DIM))
    mp = mp.at[HID + 1:HID + 1 + N_CTX, VIS_DIM:].set(ctx)

    # Prefix and suffix embeddings packed into one lane-dense slab per class row.
    presuf = jnp.concatenate([token_prefix, token_suffix],
                             axis=1).reshape(N_CLS, (1 + SUF) * CTX_DIM)

    out_flat = pl.pallas_call(
        prompt_learner_kernel,
        out_shape=jax.ShapeDtypeStruct((ROWS, FLAT), jnp.float32),
        grid_spec=pltpu.PrefetchScalarGridSpec(
            num_scalar_prefetch=0,
            grid=(1,),  # whole batch in one invocation (toy sizes; no per-element steps)
            in_specs=[
                pl.BlockSpec((B, VIS_DIM), lambda i: (0, 0)),                 # im_features
                pl.BlockSpec((8, PW), lambda i: (0, 0)),                      # packed params
                pl.BlockSpec((N_CLS, (1 + SUF) * CTX_DIM), lambda i: (0, 0)), # prefix|suffix
            ],
            out_specs=pl.BlockSpec((ROWS, FLAT), lambda i: (0, 0)),
        ),
        compiler_params=pltpu.CompilerParams(
            dimension_semantics=("arbitrary",)),
    )(im_features, mp, presuf)

    return out_flat.reshape(B, N_CLS, N_TKN, CTX_DIM)


def reference_forward(im_features, w1, b1, w2, b2, ctx, token_prefix, token_suffix):
    h = jnp.maximum(
        jnp.einsum("bv,hv->bh", im_features, w1,
                   precision=jax.lax.Precision.HIGHEST) + b1, 0.0)
    bias = jnp.einsum("bh,hc->bc", h, w2,
                      precision=jax.lax.Precision.HIGHEST) + b2
    ctx_shifted = ctx[None, :, :] + bias[:, None, :]                    # (B, N_CTX, CTX_DIM)
    ctx_b = jnp.broadcast_to(ctx_shifted[:, None], (B, N_CLS, N_CTX, CTX_DIM))
    pre_b = jnp.broadcast_to(token_prefix[None], (B, N_CLS, 1, CTX_DIM))
    suf_b = jnp.broadcast_to(token_suffix[None], (B, N_CLS, SUF, CTX_DIM))
    return jnp.concatenate([pre_b, ctx_b, suf_b], axis=2)


if __name__ == "__main__":
    key = jax.random.PRNGKey(0)
    k = jax.random.split(key, 8)

    # Deterministic synthetic parameters (shapes from __init__).
    # ctx_vectors ~ N(0, 0.02) as in nn.init.normal_(ctx_vectors, std=0.02)
    ctx = 0.02 * jax.random.normal(k[0], (N_CTX, CTX_DIM), jnp.float32)
    # meta_net linear1 / linear2
    w1 = jax.random.normal(k[1], (HID, VIS_DIM), jnp.float32) / jnp.sqrt(VIS_DIM)
    b1 = 0.01 * jax.random.normal(k[2], (1, HID), jnp.float32)
    w2 = jax.random.normal(k[3], (HID, CTX_DIM), jnp.float32) / jnp.sqrt(HID)
    b2 = 0.01 * jax.random.normal(k[4], (1, CTX_DIM), jnp.float32)
    # token_prefix / token_suffix buffers (stand-ins for CLIP token embeddings)
    token_prefix = jax.random.normal(k[5], (N_CLS, 1, CTX_DIM), jnp.float32)
    token_suffix = jax.random.normal(k[6], (N_CLS, SUF, CTX_DIM), jnp.float32)
    # image features
    im_features = jax.random.normal(k[7], (B, VIS_DIM), jnp.float32)

    out = prompt_learner_forward(im_features, w1, b1, w2, b2, ctx,
                                 token_prefix, token_suffix)
    out = jax.block_until_ready(out)

    ref = reference_forward(im_features, w1, b1, w2, b2, ctx,
                            token_prefix, token_suffix)

    assert out.shape == (B, N_CLS, N_TKN, CTX_DIM), out.shape
    assert jnp.allclose(out, ref, atol=1e-5, rtol=1e-5), "mismatch vs reference"
    print("KERNEL_OK")
</pallas_src>

<mosaic_0001>
module attributes {stable_mosaic.version = 11 : i64} {
  func.func @prompt_learner_kernel(%arg0: i32, %arg1: memref<4x32xf32, #tpu.memory_space<vmem>>, %arg2: memref<8x160xf32, #tpu.memory_space<vmem>>, %arg3: memref<3x512xf32, #tpu.memory_space<vmem>>, %arg4: memref<12x1024xf32, #tpu.memory_space<vmem>>) attributes {dimension_semantics = [#tpu.dimension_semantics<arbitrary>], iteration_bounds = array<i64: 1>, scalar_prefetch = 0 : i64, scratch_operands = 0 : i64, tpu.core_type = #tpu.core_type<tc>, window_params = [{pipeline_mode = #tpu.pipeline_mode<synchronous>, transform_indices = @transform_0, window_bounds = array<i64: 4, 32>}, {pipeline_mode = #tpu.pipeline_mode<synchronous>, transform_indices = @transform_1, window_bounds = array<i64: 8, 160>}, {pipeline_mode = #tpu.pipeline_mode<synchronous>, transform_indices = @transform_2, window_bounds = array<i64: 3, 512>}, {pipeline_mode = #tpu.pipeline_mode<synchronous>, transform_indices = @transform_3, window_bounds = array<i64: 12, 1024>}]} {
    %c0 = arith.constant 0 : index
    %c0_0 = arith.constant 0 : index
    %0 = vector.load %arg1[%c0, %c0_0] : memref<4x32xf32, #tpu.memory_space<vmem>>, vector<4x32xf32>
    %c2 = arith.constant 2 : index
    %c32 = arith.constant 32 : index
    %1 = vector.load %arg2[%c2, %c32] : memref<8x160xf32, #tpu.memory_space<vmem>>, vector<1x128xf32>
    %c0_1 = arith.constant 0 : index
    %c0_2 = arith.constant 0 : index
    %2 = vector.load %arg2[%c0_1, %c0_2] : memref<8x160xf32, #tpu.memory_space<vmem>>, vector<1x32xf32>
    %c2_3 = arith.constant 2 : index
    %c0_4 = arith.constant 0 : index
    %3 = vector.load %arg2[%c2_3, %c0_4] : memref<8x160xf32, #tpu.memory_space<vmem>>, vector<1x1xf32>
    %c0_5 = arith.constant 0 : index
    %c32_6 = arith.constant 32 : index
    %4 = vector.load %arg2[%c0_5, %c32_6] : memref<8x160xf32, #tpu.memory_space<vmem>>, vector<1x128xf32>
    %5 = vector.broadcast %2 : vector<1x32xf32> to vector<4x32xf32>
    %6 = arith.mulf %0, %5 : vector<4x32xf32>
    %cst = arith.constant dense<0.000000e+00> : vector<4xf32>
    %7 = vector.multi_reduction <add>, %6, %cst [1] : vector<4x32xf32> to vector<4xf32>
    %8 = vector.shape_cast %7 : vector<4xf32> to vector<4x1xf32>
    %9 = vector.broadcast %3 : vector<1x1xf32> to vector<4x1xf32>
    %10 = arith.addf %8, %9 : vector<4x1xf32>
    %cst_7 = arith.constant 0.000000e+00 : f32
    %11 = vector.broadcast %cst_7 : f32 to vector<4x1xf32>
    %12 = arith.maximumf %10, %11 : vector<4x1xf32>
    %13 = vector.broadcast %12 : vector<4x1xf32> to vector<4x128xf32>
    %14 = vector.broadcast %4 : vector<1x128xf32> to vector<4x128xf32>
    %15 = arith.mulf %13, %14 : vector<4x128xf32>
    %16 = vector.broadcast %1 : vector<1x128xf32> to vector<4x128xf32>
    %17 = arith.addf %16, %15 : vector<4x128xf32>
    %c1 = arith.constant 1 : index
    %c0_8 = arith.constant 0 : index
    %18 = vector.load %arg2[%c1, %c0_8] : memref<8x160xf32, #tpu.memory_space<vmem>>, vector<1x32xf32>
    %c2_9 = arith.constant 2 : index
    %c1_10 = arith.constant 1 : index
    %19 = vector.load %arg2[%c2_9, %c1_10] : memref<8x160xf32, #tpu.memory_space<vmem>>, vector<1x1xf32>
    %c1_11 = arith.constant 1 : index
    %c32_12 = arith.constant 32 : index
    %20 = vector.load %arg2[%c1_11, %c32_12] : memref<8x160xf32, #tpu.memory_space<vmem>>, vector<1x128xf32>
    %21 = vector.broadcast %18 : vector<1x32xf32> to vector<4x32xf32>
    %22 = arith.mulf %0, %21 : vector<4x32xf32>
    %cst_13 = arith.constant dense<0.000000e+00> : vector<4xf32>
    %23 = vector.multi_reduction <add>, %22, %cst_13 [1] : vector<4x32xf32> to vector<4xf32>
    %24 = vector.shape_cast %23 : vector<4xf32> to vector<4x1xf32>
    %25 = vector.broadcast %19 : vector<1x1xf32> to vector<4x1xf32>
    %26 = arith.addf %24, %25 : vector<4x1xf32>
    %cst_14 = arith.constant 0.000000e+00 : f32
    %27 = vector.broadcast %cst_14 : f32 to vector<4x1xf32>
    %28 = arith.maximumf %26, %27 : vector<4x1xf32>
    %29 = vector.broadcast %28 : vector<4x1xf32> to vector<4x128xf32>
    %30 = vector.broadcast %20 : vector<1x128xf32> to vector<4x128xf32>
    %31 = arith.mulf %29, %30 : vector<4x128xf32>
    %32 = arith.addf %17, %31 : vector<4x128xf32>
    %c0_15 = arith.constant 0 : index
    %c0_16 = arith.constant 0 : index
    %33 = vector.load %arg3[%c0_15, %c0_16] : memref<3x512xf32, #tpu.memory_space<vmem>>, vector<3x128xf32>
    %c0_17 = arith.constant 0 : index
    %c128 = arith.constant 128 : index
    %34 = vector.load %arg3[%c0_17, %c128] : memref<3x512xf32, #tpu.memory_space<vmem>>, vector<3x384xf32>
    %35 = vector.shape_cast %33 : vector<3x128xf32> to vector<1x3x128xf32>
    %36 = vector.shape_cast %35 : vector<1x3x128xf32> to vector<1x3x128xf32>
    %37 = vector.broadcast %36 : vector<1x3x128xf32> to vector<4x3x128xf32>
    %38 = vector.shape_cast %37 : vector<4x3x128xf32> to vector<12x128xf32>
    %c0_18 = arith.constant 0 : index
    %c0_19 = arith.constant 0 : index
    %39 = vector.load %arg4[%c0_18, %c0_19] : memref<12x1024xf32, #tpu.memory_space<vmem>>, vector<12x128xf32>
    tpu.vector_store %arg4[%c0_18, %c0_19], %38 {strides = array<i32>} : memref<12x1024xf32, #tpu.memory_space<vmem>>, vector<12x128xf32>,
    %c3 = arith.constant 3 : index
    %c32_20 = arith.constant 32 : index
    %40 = vector.load %arg2[%c3, %c32_20] : memref<8x160xf32, #tpu.memory_space<vmem>>, vector<1x128xf32>
    %41 = vector.broadcast %40 : vector<1x128xf32> to vector<4x128xf32>
    %42 = arith.addf %41, %32 : vector<4x128xf32>
    %43 = vector.shape_cast %42 : vector<4x128xf32> to vector<4x1x128xf32>
    %44 = vector.shape_cast %43 : vector<4x1x128xf32> to vector<4x1x128xf32>
    %45 = vector.broadcast %44 : vector<4x1x128xf32> to vector<4x3x128xf32>
    %46 = vector.shape_cast %45 : vector<4x3x128xf32> to vector<12x128xf32>
    %c0_21 = arith.constant 0 : index
    %c128_22 = arith.constant 128 : index
    %47 = vector.load %arg4[%c0_21, %c128_22] : memref<12x1024xf32, #tpu.memory_space<vmem>>, vector<12x128xf32>
    tpu.vector_store %arg4[%c0_21, %c128_22], %46 {strides = array<i32>} : memref<12x1024xf32, #tpu.memory_space<vmem>>, vector<12x128xf32>,
    %c4 = arith.constant 4 : index
    %c32_23 = arith.constant 32 : index
    %48 = vector.load %arg2[%c4, %c32_23] : memref<8x160xf32, #tpu.memory_space<vmem>>, vector<1x128xf32>
    %49 = vector.broadcast %48 : vector<1x128xf32> to vector<4x128xf32>
    %50 = arith.addf %49, %32 : vector<4x128xf32>
    %51 = vector.shape_cast %50 : vector<4x128xf32> to vector<4x1x128xf32>
    %52 = vector.shape_cast %51 : vector<4x1x128xf32> to vector<4x1x128xf32>
    %53 = vector.broadcast %52 : vector<4x1x128xf32> to vector<4x3x128xf32>
    %54 = vector.shape_cast %53 : vector<4x3x128xf32> to vector<12x128xf32>
    %c0_24 = arith.constant 0 : index
    %c256 = arith.constant 256 : index
    %55 = vector.load %arg4[%c0_24, %c256] : memref<12x1024xf32, #tpu.memory_space<vmem>>, vector<12x128xf32>
    tpu.vector_store %arg4[%c0_24, %c256], %54 {strides = array<i32>} : memref<12x1024xf32, #tpu.memory_space<vmem>>, vector<12x128xf32>,
    %c5 = arith.constant 5 : index
    %c32_25 = arith.constant 32 : index
    %56 = vector.load %arg2[%c5, %c32_25] : memref<8x160xf32, #tpu.memory_space<vmem>>, vector<1x128xf32>
    %57 = vector.broadcast %56 : vector<1x128xf32> to vector<4x128xf32>
    %58 = arith.addf %57, %32 : vector<4x128xf32>
    %59 = vector.shape_cast %58 : vector<4x128xf32> to vector<4x1x128xf32>
    %60 = vector.shape_cast %59 : vector<4x1x128xf32> to vector<4x1x128xf32>
    %61 = vector.broadcast %60 : vector<4x1x128xf32> to vector<4x3x128xf32>
    %62 = vector.shape_cast %61 : vector<4x3x128xf32> to vector<12x128xf32>
    %c0_26 = arith.constant 0 : index
    %c384 = arith.constant 384 : index
    %63 = vector.load %arg4[%c0_26, %c384] : memref<12x1024xf32, #tpu.memory_space<vmem>>, vector<12x128xf32>
    tpu.vector_store %arg4[%c0_26, %c384], %62 {strides = array<i32>} : memref<12x1024xf32, #tpu.memory_space<vmem>>, vector<12x128xf32>,
    %c6 = arith.constant 6 : index
    %c32_27 = arith.constant 32 : index
    %64 = vector.load %arg2[%c6, %c32_27] : memref<8x160xf32, #tpu.memory_space<vmem>>, vector<1x128xf32>
    %65 = vector.broadcast %64 : vector<1x128xf32> to vector<4x128xf32>
    %66 = arith.addf %65, %32 : vector<4x128xf32>
    %67 = vector.shape_cast %66 : vector<4x128xf32> to vector<4x1x128xf32>
    %68 = vector.shape_cast %67 : vector<4x1x128xf32> to vector<4x1x128xf32>
    %69 = vector.broadcast %68 : vector<4x1x128xf32> to vector<4x3x128xf32>
    %70 = vector.shape_cast %69 : vector<4x3x128xf32> to vector<12x128xf32>
    %c0_28 = arith.constant 0 : index
    %c512 = arith.constant 512 : index
    %71 = vector.load %arg4[%c0_28, %c512] : memref<12x1024xf32, #tpu.memory_space<vmem>>, vector<12x128xf32>
    tpu.vector_store %arg4[%c0_28, %c512], %70 {strides = array<i32>} : memref<12x1024xf32, #tpu.memory_space<vmem>>, vector<12x128xf32>,
    %72 = vector.shape_cast %34 : vector<3x384xf32> to vector<1x3x384xf32>
    %73 = vector.shape_cast %72 : vector<1x3x384xf32> to vector<1x3x384xf32>
    %74 = vector.broadcast %73 : vector<1x3x384xf32> to vector<4x3x384xf32>
    %75 = vector.shape_cast %74 : vector<4x3x384xf32> to vector<12x384xf32>
    %c0_29 = arith.constant 0 : index
    %c640 = arith.constant 640 : index
    %76 = vector.load %arg4[%c0_29, %c640] : memref<12x1024xf32, #tpu.memory_space<vmem>>, vector<12x384xf32>
    tpu.vector_store %arg4[%c0_29, %c640], %75 {strides = array<i32>} : memref<12x1024xf32, #tpu.memory_space<vmem>>, vector<12x384xf32>,
    return
  }
  func.func @transform_0(%arg0: i32) -> (i32, i32) {
    %c0_i32 = arith.constant 0 : i32
    %c0_i32_0 = arith.constant 0 : i32
    %c0_i32_1 = arith.constant 0 : i32
    return %c0_i32, %c0_i32_0 : i32, i32
  }
  func.func @transform_1(%arg0: i32) -> (i32, i32) {
    %c0_i32 = arith.constant 0 : i32
    %c0_i32_0 = arith.constant 0 : i32
    %c0_i32_1 = arith.constant 0 : i32
    return %c0_i32, %c0_i32_0 : i32, i32
  }
  func.func @transform_2(%arg0: i32) -> (i32, i32) {
    %c0_i32 = arith.constant 0 : i32
    %c0_i32_0 = arith.constant 0 : i32
    %c0_i32_1 = arith.constant 0 : i32
    return %c0_i32, %c0_i32_0 : i32, i32
  }
  func.func @transform_3(%arg0: i32) -> (i32, i32) {
    %c0_i32 = arith.constant 0 : i32
    %c0_i32_0 = arith.constant 0 : i32
    %c0_i32_1 = arith.constant 0 : i32
    return %c0_i32, %c0_i32_0 : i32, i32
  }
}

</mosaic_0001>

<llo_original>
// kernel: tpu_custom_call.1
$region0: #{tpu_custom_call.1}
  #allocation0 [shape = 'u32[]', space=smem, size = 0x4, offset = 0x4, fixed_abs, tag = 'smem constant byte address 0x4 - core index']
  #allocation1 [shape = 'u32[144,128]{1,0:T(1,128)}', space=vmem, size = 0x12000, scoped, tag = 'internal scratch']
  %s0 = inlined_call_operand.hbm [shape: f32[4,32], index: 0, kind: input, shape index: {}]
  %s1 = inlined_call_operand.hbm [shape: f32[8,160], index: 1, kind: input, shape index: {}]
  %s2 = inlined_call_operand.hbm [shape: f32[3,512], index: 2, kind: input, shape index: {}]
  %s3 = inlined_call_operand.hbm [shape: f32[12,1024], index: 3, kind: output, shape index: {}]
  %s4 = sld [smem:[#allocation0]]
  $region34: #{tpu_custom_call.1} parent=0
    _
  %s6 = ssub.s32 1, %s4
  %s7 = scalar_select 0, %s6, %s4
  $region1: #{tpu_custom_call.1} parent=0
    #allocation2 [shape = 'u8[2048]{0}', space=vmem, size = 0x800, scoped, tag = 'input window, operand 0, single buffered']
    #allocation3 [shape = 's32[1]{0}', space=sflag, size = 0x4, scoped, tag = 'scoped memory for tpu_custom_call.1']
    #allocation4 [shape = 's32[1]{0}', space=sflag, size = 0x4, scoped, tag = 'scoped memory for tpu_custom_call.1']
    #allocation5 [shape = 'u8[8192]{0}', space=vmem, size = 0x2000, scoped, tag = 'input window, operand 1, single buffered']
    #allocation6 [shape = 's32[1]{0}', space=sflag, size = 0x4, scoped, tag = 'scoped memory for tpu_custom_call.1']
    #allocation7 [shape = 'u8[8192]{0}', space=vmem, size = 0x2000, scoped, tag = 'input window, operand 2, single buffered']
    #allocation8 [shape = 'u8[65536]{0}', space=vmem, size = 0x10000, scoped, tag = 'output window, operand 0, single buffered']
    %8 = vsyncpa [#allocation3], 0
    %9 = vsyncpa [#allocation6], 0
    %10 = vsyncpa [#allocation4], 0
    // Predicated region
    $region2: #{tpu_custom_call.1} parent=1 // pred_check
      _
    $region3: #{tpu_custom_call.1} parent=1 // pred_check_branch
      %12 = sbr.rel (0) target = $region5
    $region4: #{tpu_custom_call.1} parent=1 // pred_region
      %s14 = ssub.s32 64, 64
      %15 = vsyncadd [#allocation3], %s14
      %s17 = sshll.u32 [#allocation2], 4
      %s18 = int_to_ptr.vmem [resolvable:$true] %s17
      %20 = dma.hbm_to_vmem [thread:$0]  %s0, 64, %s18, [#allocation3]
    $region5: #{tpu_custom_call.1} parent=1 // pred_fallthru
      _
    // Predicated region
    $region6: #{tpu_custom_call.1} parent=1 // pred_check
      _
    $region7: #{tpu_custom_call.1} parent=1 // pred_check_branch
      %22 = sbr.rel (0) target = $region9
    $region8: #{tpu_custom_call.1} parent=1 // pred_region
      %s24 = ssub.s32 256, 256
      %25 = vsyncadd [#allocation6], %s24
      %s27 = sshll.u32 [#allocation5], 4
      %s28 = int_to_ptr.vmem [resolvable:$true] %s27
      %30 = dma.hbm_to_vmem [thread:$0]  %s1, 256, %s28, [#allocation6]
    $region9: #{tpu_custom_call.1} parent=1 // pred_fallthru
      _
    // Predicated region
    $region10: #{tpu_custom_call.1} parent=1 // pred_check
      _
    $region11: #{tpu_custom_call.1} parent=1 // pred_check_branch
      %32 = sbr.rel (0) target = $region13
    $region12: #{tpu_custom_call.1} parent=1 // pred_region
      %s34 = ssub.s32 256, 256
      %35 = vsyncadd [#allocation6], %s34
      %s37 = sshll.u32 [#allocation7], 4
      %s38 = int_to_ptr.vmem [resolvable:$true] %s37
      %40 = dma.hbm_to_vmem [thread:$0]  %s2, 256, %s38, [#allocation6]
    $region13: #{tpu_custom_call.1} parent=1 // pred_fallthru
      _
    // Predicated region
    $region14: #{tpu_custom_call.1} parent=1 // pred_check
      _
    $region15: #{tpu_custom_call.1} parent=1 // pred_check_branch
      %42 = sbr.rel (0) target = $region17
    $region16: #{tpu_custom_call.1} parent=1 // pred_region
      %43 = dma.done [#allocation3], 64
    $region17: #{tpu_custom_call.1} parent=1 // pred_fallthru
      _
    // Predicated region
    $region18: #{tpu_custom_call.1} parent=1 // pred_check
      _
    $region19: #{tpu_custom_call.1} parent=1 // pred_check_branch
      %45 = sbr.rel (0) target = $region21
    $region20: #{tpu_custom_call.1} parent=1 // pred_region
      %46 = dma.done [#allocation6], 256
    $region21: #{tpu_custom_call.1} parent=1 // pred_fallthru
      _
    // Predicated region
    $region22: #{tpu_custom_call.1} parent=1 // pred_check
      _
    $region23: #{tpu_custom_call.1} parent=1 // pred_check_branch
      %48 = sbr.rel (0) target = $region25
    $region24: #{tpu_custom_call.1} parent=1 // pred_region
      %49 = dma.done [#allocation6], 256
    $region25: #{tpu_custom_call.1} parent=1 // pred_fallthru
      _
    %v50 = vld [vmem:[#allocation2] sm:$0xf]
    %v51 = vld [vmem:[#allocation5 + $0x2] ss:$0 sm:$0xff]
    %v52 = vld [vmem:[#allocation5 + $0xa] ss:$0 sm:$0xff]
    %v53 = vld [vmem:[#allocation5] ss:$0 sm:$0xff]
    %v54 = vld [vmem:[#allocation5 + $0x8] ss:$0 sm:$0xff]
    %v55 = vmul.f32 %v50, %v53
    %vm56 = vcmask 257024
    %v57 = vsel %vm56, %v55, 0.0
    %58 = vadd.xlane.f32.xlu0 %v57
    %v59 = vpop.xlane.xlu0 %58
    %v60 = vadd.f32 %v59, %v51
    %v61 = vmax.f32 %v60, 0.0
    %63 = vset.pattern.permute.xlu0 0
    %64 = vperm.xlu0 %63, %v61
    %v65 = vpop.permute.xlu0 %64
    %v67 = vmul.f32 %v65, %v53
    %v68 = vmul.f32 %v65, %v54
    %v69 = vadd.f32 %v51, %v67
    %v70 = vadd.f32 %v52, %v68
    %v71 = vld [vmem:[#allocation5 + $0x1] ss:$0 sm:$0xff]
    %v72 = vld [vmem:[#allocation5 + $0x9] ss:$0 sm:$0xff]
    %v73 = vmul.f32 %v50, %v71
    %v74 = vsel %vm56, %v73, 0.0
    %75 = vadd.xlane.f32.xlu0 %v74
    %v76 = vpop.xlane.xlu0 %75
    %v77 = vadd.f32 %v76, %v51
    %v78 = vmax.f32 %v77, 0.0
    %80 = vset.pattern.permute.xlu0 1
    %81 = vperm.xlu0 %80, %v78
    %v82 = vpop.permute.xlu0 %81
    %v84 = vmul.f32 %v82, %v71
    %v85 = vmul.f32 %v82, %v72
    %v86 = vadd.f32 %v69, %v84
    %v87 = vadd.f32 %v70, %v85
    %v88 = vld [vmem:[#allocation7] sm:$0x7]
    %v89 = vld [vmem:[#allocation7 + $0x4] sm:$0x77]
    %v90 = vld [vmem:[#allocation7 + $0xc] sm:$0x7]
    %v93 = vunpack.c.l.s4 1966171168
    %v94 = vunpack.c.0.s8 %v93
    %v95 = vlaneseq
    %v96 = vshrl.u32 %v95, 7
    %v97 = vsub.s32 %v94, %v96
    %v98 = vrot.slane %v88, %v97
    %v99 = vcombine.high %v98, %v98
    %v101 = vunpack.c.l.s4 1966171168
    %v102 = vunpack.c.0.s8 %v101
    %v103 = vlaneseq
    %v104 = vshrl.u32 %v103, 7
    %v105 = vsub.s32 %v102, %v104
    %v106 = vrot.slane %v98, %v105
    %v108 = vunpack.c.l.s4 1966171168
    %v109 = vunpack.c.0.s8 %v108
    %v110 = vlaneseq
    %v111 = vshrl.u32 %v110, 7
    %v112 = vsub.s32 %v109, %v111
    %v113 = vrot.slane %v99, %v112
    %v114 = vcombine.high %v106, %v106
    %v115 = vcombine.low %v106, %v113
    %v116 = vcombine.low %v114, %v106
    %v117 = vcombine.low %v113, %v114
    %v119 = vunpack.c.l.s4 1966171168
    %v120 = vunpack.c.0.s8 %v119
    %v121 = vlaneseq
    %v122 = vshrl.u32 %v121, 7
    %v123 = vsub.s32 %v120, %v122
    %v124 = vrot.slane %v115, %v123
    %v126 = vunpack.c.l.s4 1966171168
    %v127 = vunpack.c.0.s8 %v126
    %v128 = vlaneseq
    %v129 = vshrl.u32 %v128, 7
    %v130 = vsub.s32 %v127, %v129
    %v131 = vrot.slane %v116, %v130
    %v133 = vunpack.c.l.s4 1966171168
    %v134 = vunpack.c.0.s8 %v133
    %v135 = vlaneseq
    %v136 = vshrl.u32 %v135, 7
    %v137 = vsub.s32 %v134, %v136
    %v138 = vrot.slane %v117, %v137
    %v139 = vcombine.low %v124, %v131
    %v140 = vcombine.low %v138, %v124
    %v142 = vunpack.c.l.s4 1966171168
    %v143 = vunpack.c.0.s8 %v142
    %v144 = vlaneseq
    %v145 = vshrl.u32 %v144, 7
    %v146 = vsub.s32 %v143, %v145
    %v147 = vrot.slane %v139, %v146
    %v149 = vunpack.c.l.s4 1966171168
    %v150 = vunpack.c.0.s8 %v149
    %v151 = vlaneseq
    %v152 = vshrl.u32 %v151, 7
    %v153 = vsub.s32 %v150, %v152
    %v154 = vrot.slane %v140, %v153
    %v155 = vcombine.low %v147, %v154
    %v156 = vcombine.low %v131, %v138
    %v158 = vunpack.c.l.s4 1966171168
    %v159 = vunpack.c.0.s8 %v158
    %v160 = vlaneseq
    %v161 = vshrl.u32 %v160, 7
    %v162 = vsub.s32 %v159, %v161
    %v163 = vrot.slane %v156, %v162
    %166 = vst [vmem:[#allocation8] sm:$0xff] %v155
    %167 = vst [vmem:[#allocation8 + $0x40] sm:$0xf] %v163
    %v168 = vld [vmem:[#allocation5 + $0x3] ss:$0 sm:$0xff]
    %v169 = vld [vmem:[#allocation5 + $0xb] ss:$0 sm:$0xff]
    %v170 = vadd.f32 %v168, %v86
    %v171 = vadd.f32 %v169, %v87
    %v174 = vcombine.low %v170, %v171
    %v176 = vunpack.c.l.s4 1966171168
    %v177 = vunpack.c.0.s8 %v176
    %v178 = vlaneseq
    %v179 = vshrl.u32 %v178, 7
    %v180 = vsub.s32 %v177, %v179
    %v181 = vrot.slane %v174, %v180
    %v182 = vcombine.high %v181, %v181
    %v184 = vunpack.c.l.s4 1966171168
    %v185 = vunpack.c.0.s8 %v184
    %v186 = vlaneseq
    %v187 = vshrl.u32 %v186, 7
    %v188 = vsub.s32 %v185, %v187
    %v189 = vrot.slane %v181, %v188
    %v191 = vunpack.c.l.s4 1966171168
    %v192 = vunpack.c.0.s8 %v191
    %v193 = vlaneseq
    %v194 = vshrl.u32 %v193, 7
    %v195 = vsub.s32 %v192, %v194
    %v196 = vrot.slane %v182, %v195
    %v197 = vcombine.high %v189, %v189
    %v198 = vcombine.high %v196, %v196
    %v199 = vlaneseq
    %v200 = vshrl.u32 %v199, 7
    %v201 = vsub.s32 0, %v200
    %v202 = vrot.slane %v189, %v201
    %v203 = vlaneseq
    %v204 = vshrl.u32 %v203, 7
    %v205 = vsub.s32 1, %v204
    %v206 = vrot.slane %v189, %v205
    %v207 = vlaneseq
    %v208 = vshrl.u32 %v207, 7
    %v209 = vsub.s32 0, %v208
    %v210 = vrot.slane %v196, %v209
    %v211 = vlaneseq
    %v212 = vshrl.u32 %v211, 7
    %v213 = vsub.s32 1, %v212
    %v214 = vrot.slane %v196, %v213
    %v215 = vlaneseq
    %v216 = vshrl.u32 %v215, 7
    %v217 = vsub.s32 0, %v216
    %v218 = vrot.slane %v197, %v217
    %v219 = vlaneseq
    %v220 = vshrl.u32 %v219, 7
    %v221 = vsub.s32 1, %v220
    %v222 = vrot.slane %v197, %v221
    %v223 = vlaneseq
    %v224 = vshrl.u32 %v223, 7
    %v225 = vsub.s32 0, %v224
    %v226 = vrot.slane %v198, %v225
    %v227 = vlaneseq
    %v228 = vshrl.u32 %v227, 7
    %v229 = vsub.s32 1, %v228
    %v230 = vrot.slane %v198, %v229
    %v231 = vcombine.low %v202, %v206
    %v233 = vunpack.c.l.s4 1966171168
    %v234 = vunpack.c.0.s8 %v233
    %v235 = vlaneseq
    %v236 = vshrl.u32 %v235, 7
    %v237 = vsub.s32 %v234, %v236
    %v238 = vrot.slane %v231, %v237
    %v239 = vcombine.high %v238, %v238
    %v241 = vunpack.c.l.s4 1966171168
    %v242 = vunpack.c.0.s8 %v241
    %v243 = vlaneseq
    %v244 = vshrl.u32 %v243, 7
    %v245 = vsub.s32 %v242, %v244
    %v246 = vrot.slane %v238, %v245
    %v248 = vunpack.c.l.s4 1966171168
    %v249 = vunpack.c.0.s8 %v248
    %v250 = vlaneseq
    %v251 = vshrl.u32 %v250, 7
    %v252 = vsub.s32 %v249, %v251
    %v253 = vrot.slane %v239, %v252
    %v254 = vcombine.high %v246, %v246
    %v255 = vcombine.low %v210, %v214
    %v257 = vunpack.c.l.s4 1966171168
    %v258 = vunpack.c.0.s8 %v257
    %v259 = vlaneseq
    %v260 = vshrl.u32 %v259, 7
    %v261 = vsub.s32 %v258, %v260
    %v262 = vrot.slane %v255, %v261
    %v263 = vcombine.high %v262, %v262
    %v265 = vunpack.c.l.s4 1966171168
    %v266 = vunpack.c.0.s8 %v265
    %v267 = vlaneseq
    %v268 = vshrl.u32 %v267, 7
    %v269 = vsub.s32 %v266, %v268
    %v270 = vrot.slane %v262, %v269
    %v272 = vunpack.c.l.s4 1966171168
    %v273 = vunpack.c.0.s8 %v272
    %v274 = vlaneseq
    %v275 = vshrl.u32 %v274, 7
    %v276 = vsub.s32 %v273, %v275
    %v277 = vrot.slane %v263, %v276
    %v278 = vcombine.high %v270, %v270
    %v279 = vcombine.low %v218, %v222
    %v281 = vunpack.c.l.s4 1966171168
    %v282 = vunpack.c.0.s8 %v281
    %v283 = vlaneseq
    %v284 = vshrl.u32 %v283, 7
    %v285 = vsub.s32 %v282, %v284
    %v286 = vrot.slane %v279, %v285
    %v287 = vcombine.high %v286, %v286
    %v289 = vunpack.c.l.s4 1966171168
    %v290 = vunpack.c.0.s8 %v289
    %v291 = vlaneseq
    %v292 = vshrl.u32 %v291, 7
    %v293 = vsub.s32 %v290, %v292
    %v294 = vrot.slane %v286, %v293
    %v296 = vunpack.c.l.s4 1966171168
    %v297 = vunpack.c.0.s8 %v296
    %v298 = vlaneseq
    %v299 = vshrl.u32 %v298, 7
    %v300 = vsub.s32 %v297, %v299
    %v301 = vrot.slane %v287, %v300
    %v302 = vcombine.high %v294, %v294
    %v303 = vcombine.low %v226, %v230
    %v305 = vunpack.c.l.s4 1966171168
    %v306 = vunpack.c.0.s8 %v305
    %v307 = vlaneseq
    %v308 = vshrl.u32 %v307, 7
    %v309 = vsub.s32 %v306, %v308
    %v310 = vrot.slane %v303, %v309
    %v311 = vcombine.high %v310, %v310
    %v313 = vunpack.c.l.s4 1966171168
    %v314 = vunpack.c.0.s8 %v313
    %v315 = vlaneseq
    %v316 = vshrl.u32 %v315, 7
    %v317 = vsub.s32 %v314, %v316
    %v318 = vrot.slane %v310, %v317
    %v320 = vunpack.c.l.s4 1966171168
    %v321 = vunpack.c.0.s8 %v320
    %v322 = vlaneseq
    %v323 = vshrl.u32 %v322, 7
    %v324 = vsub.s32 %v321, %v323
    %v325 = vrot.slane %v311, %v324
    %v326 = vcombine.high %v318, %v318
    %v327 = vcombine.low %v246, %v253
    %v328 = vcombine.low %v254, %v270
    %v329 = vcombine.low %v277, %v278
    %v330 = vcombine.low %v294, %v301
    %v332 = vunpack.c.l.s4 1966171168
    %v333 = vunpack.c.0.s8 %v332
    %v334 = vlaneseq
    %v335 = vshrl.u32 %v334, 7
    %v336 = vsub.s32 %v333, %v335
    %v337 = vrot.slane %v327, %v336
    %v339 = vunpack.c.l.s4 1966171168
    %v340 = vunpack.c.0.s8 %v339
    %v341 = vlaneseq
    %v342 = vshrl.u32 %v341, 7
    %v343 = vsub.s32 %v340, %v342
    %v344 = vrot.slane %v328, %v343
    %v346 = vunpack.c.l.s4 1966171168
    %v347 = vunpack.c.0.s8 %v346
    %v348 = vlaneseq
    %v349 = vshrl.u32 %v348, 7
    %v350 = vsub.s32 %v347, %v349
    %v351 = vrot.slane %v329, %v350
    %v353 = vunpack.c.l.s4 1966171168
    %v354 = vunpack.c.0.s8 %v353
    %v355 = vlaneseq
    %v356 = vshrl.u32 %v355, 7
    %v357 = vsub.s32 %v354, %v356
    %v358 = vrot.slane %v330, %v357
    %v359 = vcombine.low %v337, %v344
    %v360 = vcombine.high %v337, %v344
    %v361 = vcombine.low %v351, %v358
    %v362 = vcombine.high %v351, %v358
    %v364 = vunpack.c.l.s4 1966171168
    %v365 = vunpack.c.0.s8 %v364
    %v366 = vlaneseq
    %v367 = vshrl.u32 %v366, 7
    %v368 = vsub.s32 %v365, %v367
    %v369 = vrot.slane %v359, %v368
    %v371 = vunpack.c.l.s4 1966171168
    %v372 = vunpack.c.0.s8 %v371
    %v373 = vlaneseq
    %v374 = vshrl.u32 %v373, 7
    %v375 = vsub.s32 %v372, %v374
    %v376 = vrot.slane %v360, %v375
    %v378 = vunpack.c.l.s4 1966171168
    %v379 = vunpack.c.0.s8 %v378
    %v380 = vlaneseq
    %v381 = vshrl.u32 %v380, 7
    %v382 = vsub.s32 %v379, %v381
    %v383 = vrot.slane %v361, %v382
    %v385 = vunpack.c.l.s4 1966171168
    %v386 = vunpack.c.0.s8 %v385
    %v387 = vlaneseq
    %v388 = vshrl.u32 %v387, 7
    %v389 = vsub.s32 %v386, %v388
    %v390 = vrot.slane %v362, %v389
    %v391 = vcombine.low %v369, %v383
    %v392 = vcombine.low %v376, %v390
    %v393 = vcombine.low %v302, %v318
    %v394 = vcombine.low %v325, %v326
    %v396 = vunpack.c.l.s4 1966171168
    %v397 = vunpack.c.0.s8 %v396
    %v398 = vlaneseq
    %v399 = vshrl.u32 %v398, 7
    %v400 = vsub.s32 %v397, %v399
    %v401 = vrot.slane %v393, %v400
    %v403 = vunpack.c.l.s4 1966171168
    %v404 = vunpack.c.0.s8 %v403
    %v405 = vlaneseq
    %v406 = vshrl.u32 %v405, 7
    %v407 = vsub.s32 %v404, %v406
    %v408 = vrot.slane %v394, %v407
    %v409 = vcombine.low %v401, %v408
    %v410 = vcombine.high %v401, %v408
    %v412 = vunpack.c.l.s4 1966171168
    %v413 = vunpack.c.0.s8 %v412
    %v414 = vlaneseq
    %v415 = vshrl.u32 %v414, 7
    %v416 = vsub.s32 %v413, %v415
    %v417 = vrot.slane %v409, %v416
    %v419 = vunpack.c.l.s4 1966171168
    %v420 = vunpack.c.0.s8 %v419
    %v421 = vlaneseq
    %v422 = vshrl.u32 %v421, 7
    %v423 = vsub.s32 %v420, %v422
    %v424 = vrot.slane %v410, %v423
    %425 = vrot.lane.b32.xlu0 %v391, 96
    %v426 = vpop.permute.xlu0 %425
    %427 = vrot.lane.b32.xlu0 %v392, 96
    %v428 = vpop.permute.xlu0 %427
    %429 = vrot.lane.b32.xlu0 %v417, 96
    %v430 = vpop.permute.xlu0 %429
    %431 = vrot.lane.b32.xlu0 %v424, 96
    %v432 = vpop.permute.xlu0 %431
    %vm433 = vcmask 785408
    %v434 = vsel %vm433, %v426, %v428
    %v435 = vsel %vm433, %v430, %v432
    %438 = vst [vmem:[#allocation8 + $0x8] sm:$0xff] %v434
    %439 = vst [vmem:[#allocation8 + $0x48] sm:$0xf] %v435
    %v440 = vld [vmem:[#allocation5 + $0x4] ss:$0 sm:$0xff]
    %v441 = vld [vmem:[#allocation5 + $0xc] ss:$0 sm:$0xff]
    %v442 = vadd.f32 %v440, %v86
    %v443 = vadd.f32 %v441, %v87
    %v446 = vcombine.low %v442, %v443
    %v448 = vunpack.c.l.s4 1966171168
    %v449 = vunpack.c.0.s8 %v448
    %v450 = vlaneseq
    %v451 = vshrl.u32 %v450, 7
    %v452 = vsub.s32 %v449, %v451
    %v453 = vrot.slane %v446, %v452
    %v454 = vcombine.high %v453, %v453
    %v456 = vunpack.c.l.s4 1966171168
    %v457 = vunpack.c.0.s8 %v456
    %v458 = vlaneseq
    %v459 = vshrl.u32 %v458, 7
    %v460 = vsub.s32 %v457, %v459
    %v461 = vrot.slane %v453, %v460
    %v463 = vunpack.c.l.s4 1966171168
    %v464 = vunpack.c.0.s8 %v463
    %v465 = vlaneseq
    %v466 = vshrl.u32 %v465, 7
    %v467 = vsub.s32 %v464, %v466
    %v468 = vrot.slane %v454, %v467
    %v469 = vcombine.high %v461, %v461
    %v470 = vcombine.high %v468, %v468
    %v471 = vlaneseq
    %v472 = vshrl.u32 %v471, 7
    %v473 = vsub.s32 0, %v472
    %v474 = vrot.slane %v461, %v473
    %v475 = vlaneseq
    %v476 = vshrl.u32 %v475, 7
    %v477 = vsub.s32 1, %v476
    %v478 = vrot.slane %v461, %v477
    %v479 = vlaneseq
    %v480 = vshrl.u32 %v479, 7
    %v481 = vsub.s32 0, %v480
    %v482 = vrot.slane %v468, %v481
    %v483 = vlaneseq
    %v484 = vshrl.u32 %v483, 7
    %v485 = vsub.s32 1, %v484
    %v486 = vrot.slane %v468, %v485
    %v487 = vlaneseq
    %v488 = vshrl.u32 %v487, 7
    %v489 = vsub.s32 0, %v488
    %v490 = vrot.slane %v469, %v489
    %v491 = vlaneseq
    %v492 = vshrl.u32 %v491, 7
    %v493 = vsub.s32 1, %v492
    %v494 = vrot.slane %v469, %v493
    %v495 = vlaneseq
    %v496 = vshrl.u32 %v495, 7
    %v497 = vsub.s32 0, %v496
    %v498 = vrot.slane %v470, %v497
    %v499 = vlaneseq
    %v500 = vshrl.u32 %v499, 7
    %v501 = vsub.s32 1, %v500
    %v502 = vrot.slane %v470, %v501
    %v503 = vcombine.low %v474, %v478
    %v505 = vunpack.c.l.s4 1966171168
    %v506 = vunpack.c.0.s8 %v505
    %v507 = vlaneseq
    %v508 = vshrl.u32 %v507, 7
    %v509 = vsub.s32 %v506, %v508
    %v510 = vrot.slane %v503, %v509
    %v511 = vcombine.high %v510, %v510
    %v513 = vunpack.c.l.s4 1966171168
    %v514 = vunpack.c.0.s8 %v513
    %v515 = vlaneseq
    %v516 = vshrl.u32 %v515, 7
    %v517 = vsub.s32 %v514, %v516
    %v518 = vrot.slane %v510, %v517
    %v520 = vunpack.c.l.s4 1966171168
    %v521 = vunpack.c.0.s8 %v520
    %v522 = vlaneseq
    %v523 = vshrl.u32 %v522, 7
    %v524 = vsub.s32 %v521, %v523
    %v525 = vrot.slane %v511, %v524
    %v526 = vcombine.high %v518, %v518
    %v527 = vcombine.low %v482, %v486
    %v529 = vunpack.c.l.s4 1966171168
    %v530 = vunpack.c.0.s8 %v529
    %v531 = vlaneseq
    %v532 = vshrl.u32 %v531, 7
    %v533 = vsub.s32 %v530, %v532
    %v534 = vrot.slane %v527, %v533
    %v535 = vcombine.high %v534, %v534
    %v537 = vunpack.c.l.s4 1966171168
    %v538 = vunpack.c.0.s8 %v537
    %v539 = vlaneseq
    %v540 = vshrl.u32 %v539, 7
    %v541 = vsub.s32 %v538, %v540
    %v542 = vrot.slane %v534, %v541
    %v544 = vunpack.c.l.s4 1966171168
    %v545 = vunpack.c.0.s8 %v544
    %v546 = vlaneseq
    %v547 = vshrl.u32 %v546, 7
    %v548 = vsub.s32 %v545, %v547
    %v549 = vrot.slane %v535, %v548
    %v550 = vcombine.high %v542, %v542
    %v551 = vcombine.low %v490, %v494
    %v553 = vunpack.c.l.s4 1966171168
    %v554 = vunpack.c.0.s8 %v553
    %v555 = vlaneseq
    %v556 = vshrl.u32 %v555, 7
    %v557 = vsub.s32 %v554, %v556
    %v558 = vrot.slane %v551, %v557
    %v559 = vcombine.high %v558, %v558
    %v561 = vunpack.c.l.s4 1966171168
    %v562 = vunpack.c.0.s8 %v561
    %v563 = vlaneseq
    %v564 = vshrl.u32 %v563, 7
    %v565 = vsub.s32 %v562, %v564
    %v566 = vrot.slane %v558, %v565
    %v568 = vunpack.c.l.s4 1966171168
    %v569 = vunpack.c.0.s8 %v568
    %v570 = vlaneseq
    %v571 = vshrl.u32 %v570, 7
    %v572 = vsub.s32 %v569, %v571
    %v573 = vrot.slane %v559, %v572
    %v574 = vcombine.high %v566, %v566
    %v575 = vcombine.low %v498, %v502
    %v577 = vunpack.c.l.s4 1966171168
    %v578 = vunpack.c.0.s8 %v577
    %v579 = vlaneseq
    %v580 = vshrl.u32 %v579, 7
    %v581 = vsub.s32 %v578, %v580
    %v582 = vrot.slane %v575, %v581
    %v583 = vcombine.high %v582, %v582
    %v585 = vunpack.c.l.s4 1966171168
    %v586 = vunpack.c.0.s8 %v585
    %v587 = vlaneseq
    %v588 = vshrl.u32 %v587, 7
    %v589 = vsub.s32 %v586, %v588
    %v590 = vrot.slane %v582, %v589
    %v592 = vunpack.c.l.s4 1966171168
    %v593 = vunpack.c.0.s8 %v592
    %v594 = vlaneseq
    %v595 = vshrl.u32 %v594, 7
    %v596 = vsub.s32 %v593, %v595
    %v597 = vrot.slane %v583, %v596
    %v598 = vcombine.high %v590, %v590
    %v599 = vcombine.low %v518, %v525
    %v600 = vcombine.low %v526, %v542
    %v601 = vcombine.low %v549, %v550
    %v602 = vcombine.low %v566, %v573
    %v604 = vunpack.c.l.s4 1966171168
    %v605 = vunpack.c.0.s8 %v604
    %v606 = vlaneseq
    %v607 = vshrl.u32 %v606, 7
    %v608 = vsub.s32 %v605, %v607
    %v609 = vrot.slane %v599, %v608
    %v611 = vunpack.c.l.s4 1966171168
    %v612 = vunpack.c.0.s8 %v611
    %v613 = vlaneseq
    %v614 = vshrl.u32 %v613, 7
    %v615 = vsub.s32 %v612, %v614
    %v616 = vrot.slane %v600, %v615
    %v618 = vunpack.c.l.s4 1966171168
    %v619 = vunpack.c.0.s8 %v618
    %v620 = vlaneseq
    %v621 = vshrl.u32 %v620, 7
    %v622 = vsub.s32 %v619, %v621
    %v623 = vrot.slane %v601, %v622
    %v625 = vunpack.c.l.s4 1966171168
    %v626 = vunpack.c.0.s8 %v625
    %v627 = vlaneseq
    %v628 = vshrl.u32 %v627, 7
    %v629 = vsub.s32 %v626, %v628
    %v630 = vrot.slane %v602, %v629
    %v631 = vcombine.low %v609, %v616
    %v632 = vcombine.high %v609, %v616
    %v633 = vcombine.low %v623, %v630
    %v634 = vcombine.high %v623, %v630
    %v636 = vunpack.c.l.s4 1966171168
    %v637 = vunpack.c.0.s8 %v636
    %v638 = vlaneseq
    %v639 = vshrl.u32 %v638, 7
    %v640 = vsub.s32 %v637, %v639
    %v641 = vrot.slane %v631, %v640
    %v643 = vunpack.c.l.s4 1966171168
    %v644 = vunpack.c.0.s8 %v643
    %v645 = vlaneseq
    %v646 = vshrl.u32 %v645, 7
    %v647 = vsub.s32 %v644, %v646
    %v648 = vrot.slane %v632, %v647
    %v650 = vunpack.c.l.s4 1966171168
    %v651 = vunpack.c.0.s8 %v650
    %v652 = vlaneseq
    %v653 = vshrl.u32 %v652, 7
    %v654 = vsub.s32 %v651, %v653
    %v655 = vrot.slane %v633, %v654
    %v657 = vunpack.c.l.s4 1966171168
    %v658 = vunpack.c.0.s8 %v657
    %v659 = vlaneseq
    %v660 = vshrl.u32 %v659, 7
    %v661 = vsub.s32 %v658, %v660
    %v662 = vrot.slane %v634, %v661
    %v663 = vcombine.low %v641, %v655
    %v664 = vcombine.low %v648, %v662
    %v665 = vcombine.low %v574, %v590
    %v666 = vcombine.low %v597, %v598
    %v668 = vunpack.c.l.s4 1966171168
    %v669 = vunpack.c.0.s8 %v668
    %v670 = vlaneseq
    %v671 = vshrl.u32 %v670, 7
    %v672 = vsub.s32 %v669, %v671
    %v673 = vrot.slane %v665, %v672
    %v675 = vunpack.c.l.s4 1966171168
    %v676 = vunpack.c.0.s8 %v675
    %v677 = vlaneseq
    %v678 = vshrl.u32 %v677, 7
    %v679 = vsub.s32 %v676, %v678
    %v680 = vrot.slane %v666, %v679
    %v681 = vcombine.low %v673, %v680
    %v682 = vcombine.high %v673, %v680
    %v684 = vunpack.c.l.s4 1966171168
    %v685 = vunpack.c.0.s8 %v684
    %v686 = vlaneseq
    %v687 = vshrl.u32 %v686, 7
    %v688 = vsub.s32 %v685, %v687
    %v689 = vrot.slane %v681, %v688
    %v691 = vunpack.c.l.s4 1966171168
    %v692 = vunpack.c.0.s8 %v691
    %v693 = vlaneseq
    %v694 = vshrl.u32 %v693, 7
    %v695 = vsub.s32 %v692, %v694
    %v696 = vrot.slane %v682, %v695
    %697 = vrot.lane.b32.xlu0 %v663, 96
    %v698 = vpop.permute.xlu0 %697
    %699 = vrot.lane.b32.xlu0 %v664, 96
    %v700 = vpop.permute.xlu0 %699
    %701 = vrot.lane.b32.xlu0 %v689, 96
    %v702 = vpop.permute.xlu0 %701
    %703 = vrot.lane.b32.xlu0 %v696, 96
    %v704 = vpop.permute.xlu0 %703
    %v705 = vsel %vm433, %v698, %v700
    %v706 = vsel %vm433, %v702, %v704
    %709 = vst [vmem:[#allocation8 + $0x10] sm:$0xff] %v705
    %710 = vst [vmem:[#allocation8 + $0x50] sm:$0xf] %v706
    %v711 = vld [vmem:[#allocation5 + $0x5] ss:$0 sm:$0xff]
    %v712 = vld [vmem:[#allocation5 + $0xd] ss:$0 sm:$0xff]
    %v713 = vadd.f32 %v711, %v86
    %v714 = vadd.f32 %v712, %v87
    %v717 = vcombine.low %v713, %v714
    %v719 = vunpack.c.l.s4 1966171168
    %v720 = vunpack.c.0.s8 %v719
    %v721 = vlaneseq
    %v722 = vshrl.u32 %v721, 7
    %v723 = vsub.s32 %v720, %v722
    %v724 = vrot.slane %v717, %v723
    %v725 = vcombine.high %v724, %v724
    %v727 = vunpack.c.l.s4 1966171168
    %v728 = vunpack.c.0.s8 %v727
    %v729 = vlaneseq
    %v730 = vshrl.u32 %v729, 7
    %v731 = vsub.s32 %v728, %v730
    %v732 = vrot.slane %v724, %v731
    %v734 = vunpack.c.l.s4 1966171168
    %v735 = vunpack.c.0.s8 %v734
    %v736 = vlaneseq
    %v737 = vshrl.u32 %v736, 7
    %v738 = vsub.s32 %v735, %v737
    %v739 = vrot.slane %v725, %v738
    %v740 = vcombine.high %v732, %v732
    %v741 = vcombine.high %v739, %v739
    %v742 = vlaneseq
    %v743 = vshrl.u32 %v742, 7
    %v744 = vsub.s32 0, %v743
    %v745 = vrot.slane %v732, %v744
    %v746 = vlaneseq
    %v747 = vshrl.u32 %v746, 7
    %v748 = vsub.s32 1, %v747
    %v749 = vrot.slane %v732, %v748
    %v750 = vlaneseq
    %v751 = vshrl.u32 %v750, 7
    %v752 = vsub.s32 0, %v751
    %v753 = vrot.slane %v739, %v752
    %v754 = vlaneseq
    %v755 = vshrl.u32 %v754, 7
    %v756 = vsub.s32 1, %v755
    %v757 = vrot.slane %v739, %v756
    %v758 = vlaneseq
    %v759 = vshrl.u32 %v758, 7
    %v760 = vsub.s32 0, %v759
    %v761 = vrot.slane %v740, %v760
    %v762 = vlaneseq
    %v763 = vshrl.u32 %v762, 7
    %v764 = vsub.s32 1, %v763
    %v765 = vrot.slane %v740, %v764
    %v766 = vlaneseq
    %v767 = vshrl.u32 %v766, 7
    %v768 = vsub.s32 0, %v767
    %v769 = vrot.slane %v741, %v768
    %v770 = vlaneseq
    %v771 = vshrl.u32 %v770, 7
    %v772 = vsub.s32 1, %v771
    %v773 = vrot.slane %v741, %v772
    %v774 = vcombine.low %v745, %v749
    %v776 = vunpack.c.l.s4 1966171168
    %v777 = vunpack.c.0.s8 %v776
    %v778 = vlaneseq
    %v779 = vshrl.u32 %v778, 7
    %v780 = vsub.s32 %v777, %v779
    %v781 = vrot.slane %v774, %v780
    %v782 = vcombine.high %v781, %v781
    %v784 = vunpack.c.l.s4 1966171168
    %v785 = vunpack.c.0.s8 %v784
    %v786 = vlaneseq
    %v787 = vshrl.u32 %v786, 7
    %v788 = vsub.s32 %v785, %v787
    %v789 = vrot.slane %v781, %v788
    %v791 = vunpack.c.l.s4 1966171168
    %v792 = vunpack.c.0.s8 %v791
    %v793 = vlaneseq
    %v794 = vshrl.u32 %v793, 7
    %v795 = vsub.s32 %v792, %v794
    %v796 = vrot.slane %v782, %v795
    %v797 = vcombine.high %v789, %v789
    %v798 = vcombine.low %v753, %v757
    %v800 = vunpack.c.l.s4 1966171168
    %v801 = vunpack.c.0.s8 %v800
    %v802 = vlaneseq
    %v803 = vshrl.u32 %v802, 7
    %v804 = vsub.s32 %v801, %v803
    %v805 = vrot.slane %v798, %v804
    %v806 = vcombine.high %v805, %v805
    %v808 = vunpack.c.l.s4 1966171168
    %v809 = vunpack.c.0.s8 %v808
    %v810 = vlaneseq
    %v811 = vshrl.u32 %v810, 7
    %v812 = vsub.s32 %v809, %v811
    %v813 = vrot.slane %v805, %v812
    %v815 = vunpack.c.l.s4 1966171168
    %v816 = vunpack.c.0.s8 %v815
    %v817 = vlaneseq
    %v818 = vshrl.u32 %v817, 7
    %v819 = vsub.s32 %v816, %v818
    %v820 = vrot.slane %v806, %v819
    %v821 = vcombine.high %v813, %v813
    %v822 = vcombine.low %v761, %v765
    %v824 = vunpack.c.l.s4 1966171168
    %v825 = vunpack.c.0.s8 %v824
    %v826 = vlaneseq
    %v827 = vshrl.u32 %v826, 7
    %v828 = vsub.s32 %v825, %v827
    %v829 = vrot.slane %v822, %v828
    %v830 = vcombine.high %v829, %v829
    %v832 = vunpack.c.l.s4 1966171168
    %v833 = vunpack.c.0.s8 %v832
    %v834 = vlaneseq
    %v835 = vshrl.u32 %v834, 7
    %v836 = vsub.s32 %v833, %v835
    %v837 = vrot.slane %v829, %v836
    %v839 = vunpack.c.l.s4 1966171168
    %v840 = vunpack.c.0.s8 %v839
    %v841 = vlaneseq
    %v842 = vshrl.u32 %v841, 7
    %v843 = vsub.s32 %v840, %v842
    %v844 = vrot.slane %v830, %v843
    %v845 = vcombine.high %v837, %v837
    %v846 = vcombine.low %v769, %v773
    %v848 = vunpack.c.l.s4 1966171168
    %v849 = vunpack.c.0.s8 %v848
    %v850 = vlaneseq
    %v851 = vshrl.u32 %v850, 7
    %v852 = vsub.s32 %v849, %v851
    %v853 = vrot.slane %v846, %v852
    %v854 = vcombine.high %v853, %v853
    %v856 = vunpack.c.l.s4 1966171168
    %v857 = vunpack.c.0.s8 %v856
    %v858 = vlaneseq
    %v859 = vshrl.u32 %v858, 7
    %v860 = vsub.s32 %v857, %v859
    %v861 = vrot.slane %v853, %v860
    %v863 = vunpack.c.l.s4 1966171168
    %v864 = vunpack.c.0.s8 %v863
    %v865 = vlaneseq
    %v866 = vshrl.u32 %v865, 7
    %v867 = vsub.s32 %v864, %v866
    %v868 = vrot.slane %v854, %v867
    %v869 = vcombine.high %v861, %v861
    %v870 = vcombine.low %v789, %v796
    %v871 = vcombine.low %v797, %v813
    %v872 = vcombine.low %v820, %v821
    %v873 = vcombine.low %v837, %v844
    %v875 = vunpack.c.l.s4 1966171168
    %v876 = vunpack.c.0.s8 %v875
    %v877 = vlaneseq
    %v878 = vshrl.u32 %v877, 7
    %v879 = vsub.s32 %v876, %v878
    %v880 = vrot.slane %v870, %v879
    %v882 = vunpack.c.l.s4 1966171168
    %v883 = vunpack.c.0.s8 %v882
    %v884 = vlaneseq
    %v885 = vshrl.u32 %v884, 7
    %v886 = vsub.s32 %v883, %v885
    %v887 = vrot.slane %v871, %v886
    %v889 = vunpack.c.l.s4 1966171168
    %v890 = vunpack.c.0.s8 %v889
    %v891 = vlaneseq
    %v892 = vshrl.u32 %v891, 7
    %v893 = vsub.s32 %v890, %v892
    %v894 = vrot.slane %v872, %v893
    %v896 = vunpack.c.l.s4 1966171168
    %v897 = vunpack.c.0.s8 %v896
    %v898 = vlaneseq
    %v899 = vshrl.u32 %v898, 7
    %v900 = vsub.s32 %v897, %v899
    %v901 = vrot.slane %v873, %v900
    %v902 = vcombine.low %v880, %v887
    %v903 = vcombine.high %v880, %v887
    %v904 = vcombine.low %v894, %v901
    %v905 = vcombine.high %v894, %v901
    %v907 = vunpack.c.l.s4 1966171168
    %v908 = vunpack.c.0.s8 %v907
    %v909 = vlaneseq
    %v910 = vshrl.u32 %v909, 7
    %v911 = vsub.s32 %v908, %v910
    %v912 = vrot.slane %v902, %v911
    %v914 = vunpack.c.l.s4 1966171168
    %v915 = vunpack.c.0.s8 %v914
    %v916 = vlaneseq
    %v917 = vshrl.u32 %v916, 7
    %v918 = vsub.s32 %v915, %v917
    %v919 = vrot.slane %v903, %v918
    %v921 = vunpack.c.l.s4 1966171168
    %v922 = vunpack.c.0.s8 %v921
    %v923 = vlaneseq
    %v924 = vshrl.u32 %v923, 7
    %v925 = vsub.s32 %v922, %v924
    %v926 = vrot.slane %v904, %v925
    %v928 = vunpack.c.l.s4 1966171168
    %v929 = vunpack.c.0.s8 %v928
    %v930 = vlaneseq
    %v931 = vshrl.u32 %v930, 7
    %v932 = vsub.s32 %v929, %v931
    %v933 = vrot.slane %v905, %v932
    %v934 = vcombine.low %v912, %v926
    %v935 = vcombine.low %v919, %v933
    %v936 = vcombine.low %v845, %v861
    %v937 = vcombine.low %v868, %v869
    %v939 = vunpack.c.l.s4 1966171168
    %v940 = vunpack.c.0.s8 %v939
    %v941 = vlaneseq
    %v942 = vshrl.u32 %v941, 7
    %v943 = vsub.s32 %v940, %v942
    %v944 = vrot.slane %v936, %v943
    %v946 = vunpack.c.l.s4 1966171168
    %v947 = vunpack.c.0.s8 %v946
    %v948 = vlaneseq
    %v949 = vshrl.u32 %v948, 7
    %v950 = vsub.s32 %v947, %v949
    %v951 = vrot.slane %v937, %v950
    %v952 = vcombine.low %v944, %v951
    %v953 = vcombine.high %v944, %v951
    %v955 = vunpack.c.l.s4 1966171168
    %v956 = vunpack.c.0.s8 %v955
    %v957 = vlaneseq
    %v958 = vshrl.u32 %v957, 7
    %v959 = vsub.s32 %v956, %v958
    %v960 = vrot.slane %v952, %v959
    %v962 = vunpack.c.l.s4 1966171168
    %v963 = vunpack.c.0.s8 %v962
    %v964 = vlaneseq
    %v965 = vshrl.u32 %v964, 7
    %v966 = vsub.s32 %v963, %v965
    %v967 = vrot.slane %v953, %v966
    %968 = vrot.lane.b32.xlu0 %v934, 96
    %v969 = vpop.permute.xlu0 %968
    %970 = vrot.lane.b32.xlu0 %v935, 96
    %v971 = vpop.permute.xlu0 %970
    %972 = vrot.lane.b32.xlu0 %v960, 96
    %v973 = vpop.permute.xlu0 %972
    %974 = vrot.lane.b32.xlu0 %v967, 96
    %v975 = vpop.permute.xlu0 %974
    %v976 = vsel %vm433, %v969, %v971
    %v977 = vsel %vm433, %v973, %v975
    %980 = vst [vmem:[#allocation8 + $0x18] sm:$0xff] %v976
    %981 = vst [vmem:[#allocation8 + $0x58] sm:$0xf] %v977
    %v982 = vld [vmem:[#allocation5 + $0x6] ss:$0 sm:$0xff]
    %v983 = vld [vmem:[#allocation5 + $0xe] ss:$0 sm:$0xff]
    %v984 = vadd.f32 %v982, %v86
    %v985 = vadd.f32 %v983, %v87
    %v988 = vcombine.low %v984, %v985
    %v990 = vunpack.c.l.s4 1966171168
    %v991 = vunpack.c.0.s8 %v990
    %v992 = vlaneseq
    %v993 = vshrl.u32 %v992, 7
    %v994 = vsub.s32 %v991, %v993
    %v995 = vrot.slane %v988, %v994
    %v996 = vcombine.high %v995, %v995
    %v998 = vunpack.c.l.s4 1966171168
    %v999 = vunpack.c.0.s8 %v998
    %v1000 = vlaneseq
    %v1001 = vshrl.u32 %v1000, 7
    %v1002 = vsub.s32 %v999, %v1001
    %v1003 = vrot.slane %v995, %v1002
    %v1005 = vunpack.c.l.s4 1966171168
    %v1006 = vunpack.c.0.s8 %v1005
    %v1007 = vlaneseq
    %v1008 = vshrl.u32 %v1007, 7
    %v1009 = vsub.s32 %v1006, %v1008
    %v1010 = vrot.slane %v996, %v1009
    %v1011 = vcombine.high %v1003, %v1003
    %v1012 = vcombine.high %v1010, %v1010
    %v1013 = vlaneseq
    %v1014 = vshrl.u32 %v1013, 7
    %v1015 = vsub.s32 0, %v1014
    %v1016 = vrot.slane %v1003, %v1015
    %v1017 = vlaneseq
    %v1018 = vshrl.u32 %v1017, 7
    %v1019 = vsub.s32 1, %v1018
    %v1020 = vrot.slane %v1003, %v1019
    %v1021 = vlaneseq
    %v1022 = vshrl.u32 %v1021, 7
    %v1023 = vsub.s32 0, %v1022
    %v1024 = vrot.slane %v1010, %v1023
    %v1025 = vlaneseq
    %v1026 = vshrl.u32 %v1025, 7
    %v1027 = vsub.s32 1, %v1026
    %v1028 = vrot.slane %v1010, %v1027
    %v1029 = vlaneseq
    %v1030 = vshrl.u32 %v1029, 7
    %v1031 = vsub.s32 0, %v1030
    %v1032 = vrot.slane %v1011, %v1031
    %v1033 = vlaneseq
    %v1034 = vshrl.u32 %v1033, 7
    %v1035 = vsub.s32 1, %v1034
    %v1036 = vrot.slane %v1011, %v1035
    %v1037 = vlaneseq
    %v1038 = vshrl.u32 %v1037, 7
    %v1039 = vsub.s32 0, %v1038
    %v1040 = vrot.slane %v1012, %v1039
    %v1041 = vlaneseq
    %v1042 = vshrl.u32 %v1041, 7
    %v1043 = vsub.s32 1, %v1042
    %v1044 = vrot.slane %v1012, %v1043
    %v1045 = vcombine.low %v1016, %v1020
    %v1047 = vunpack.c.l.s4 1966171168
    %v1048 = vunpack.c.0.s8 %v1047
    %v1049 = vlaneseq
    %v1050 = vshrl.u32 %v1049, 7
    %v1051 = vsub.s32 %v1048, %v1050
    %v1052 = vrot.slane %v1045, %v1051
    %v1053 = vcombine.high %v1052, %v1052
    %v1055 = vunpack.c.l.s4 1966171168
    %v1056 = vunpack.c.0.s8 %v1055
    %v1057 = vlaneseq
    %v1058 = vshrl.u32 %v1057, 7
    %v1059 = vsub.s32 %v1056, %v1058
    %v1060 = vrot.slane %v1052, %v1059
    %v1062 = vunpack.c.l.s4 1966171168
    %v1063 = vunpack.c.0.s8 %v1062
    %v1064 = vlaneseq
    %v1065 = vshrl.u32 %v1064, 7
    %v1066 = vsub.s32 %v1063, %v1065
    %v1067 = vrot.slane %v1053, %v1066
    %v1068 = vcombine.high %v1060, %v1060
    %v1069 = vcombine.low %v1024, %v1028
    %v1071 = vunpack.c.l.s4 1966171168
    %v1072 = vunpack.c.0.s8 %v1071
    %v1073 = vlaneseq
    %v1074 = vshrl.u32 %v1073, 7
    %v1075 = vsub.s32 %v1072, %v1074
    %v1076 = vrot.slane %v1069, %v1075
    %v1077 = vcombine.high %v1076, %v1076
    %v1079 = vunpack.c.l.s4 1966171168
    %v1080 = vunpack.c.0.s8 %v1079
    %v1081 = vlaneseq
    %v1082 = vshrl.u32 %v1081, 7
    %v1083 = vsub.s32 %v1080, %v1082
    %v1084 = vrot.slane %v1076, %v1083
    %v1086 = vunpack.c.l.s4 1966171168
    %v1087 = vunpack.c.0.s8 %v1086
    %v1088 = vlaneseq
    %v1089 = vshrl.u32 %v1088, 7
    %v1090 = vsub.s32 %v1087, %v1089
    %v1091 = vrot.slane %v1077, %v1090
    %v1092 = vcombine.high %v1084, %v1084
    %v1093 = vcombine.low %v1032, %v1036
    %v1095 = vunpack.c.l.s4 1966171168
    %v1096 = vunpack.c.0.s8 %v1095
    %v1097 = vlaneseq
    %v1098 = vshrl.u32 %v1097, 7
    %v1099 = vsub.s32 %v1096, %v1098
    %v1100 = vrot.slane %v1093, %v1099
    %v1101 = vcombine.high %v1100, %v1100
    %v1103 = vunpack.c.l.s4 1966171168
    %v1104 = vunpack.c.0.s8 %v1103
    %v1105 = vlaneseq
    %v1106 = vshrl.u32 %v1105, 7
    %v1107 = vsub.s32 %v1104, %v1106
    %v1108 = vrot.slane %v1100, %v1107
    %v1110 = vunpack.c.l.s4 1966171168
    %v1111 = vunpack.c.0.s8 %v1110
    %v1112 = vlaneseq
    %v1113 = vshrl.u32 %v1112, 7
    %v1114 = vsub.s32 %v1111, %v1113
    %v1115 = vrot.slane %v1101, %v1114
    %v1116 = vcombine.high %v1108, %v1108
    %v1117 = vcombine.low %v1040, %v1044
    %v1119 = vunpack.c.l.s4 1966171168
    %v1120 = vunpack.c.0.s8 %v1119
    %v1121 = vlaneseq
    %v1122 = vshrl.u32 %v1121, 7
    %v1123 = vsub.s32 %v1120, %v1122
    %v1124 = vrot.slane %v1117, %v1123
    %v1125 = vcombine.high %v1124, %v1124
    %v1127 = vunpack.c.l.s4 1966171168
    %v1128 = vunpack.c.0.s8 %v1127
    %v1129 = vlaneseq
    %v1130 = vshrl.u32 %v1129, 7
    %v1131 = vsub.s32 %v1128, %v1130
    %v1132 = vrot.slane %v1124, %v1131
    %v1134 = vunpack.c.l.s4 1966171168
    %v1135 = vunpack.c.0.s8 %v1134
    %v1136 = vlaneseq
    %v1137 = vshrl.u32 %v1136, 7
    %v1138 = vsub.s32 %v1135, %v1137
    %v1139 = vrot.slane %v1125, %v1138
    %v1140 = vcombine.high %v1132, %v1132
    %v1141 = vcombine.low %v1060, %v1067
    %v1142 = vcombine.low %v1068, %v1084
    %v1143 = vcombine.low %v1091, %v1092
    %v1144 = vcombine.low %v1108, %v1115
    %v1146 = vunpack.c.l.s4 1966171168
    %v1147 = vunpack.c.0.s8 %v1146
    %v1148 = vlaneseq
    %v1149 = vshrl.u32 %v1148, 7
    %v1150 = vsub.s32 %v1147, %v1149
    %v1151 = vrot.slane %v1141, %v1150
    %v1153 = vunpack.c.l.s4 1966171168
    %v1154 = vunpack.c.0.s8 %v1153
    %v1155 = vlaneseq
    %v1156 = vshrl.u32 %v1155, 7
    %v1157 = vsub.s32 %v1154, %v1156
    %v1158 = vrot.slane %v1142, %v1157
    %v1160 = vunpack.c.l.s4 1966171168
    %v1161 = vunpack.c.0.s8 %v1160
    %v1162 = vlaneseq
    %v1163 = vshrl.u32 %v1162, 7
    %v1164 = vsub.s32 %v1161, %v1163
    %v1165 = vrot.slane %v1143, %v1164
    %v1167 = vunpack.c.l.s4 1966171168
    %v1168 = vunpack.c.0.s8 %v1167
    %v1169 = vlaneseq
    %v1170 = vshrl.u32 %v1169, 7
    %v1171 = vsub.s32 %v1168, %v1170
    %v1172 = vrot.slane %v1144, %v1171
    %v1173 = vcombine.low %v1151, %v1158
    %v1174 = vcombine.high %v1151, %v1158
    %v1175 = vcombine.low %v1165, %v1172
    %v1176 = vcombine.high %v1165, %v1172
    %v1178 = vunpack.c.l.s4 1966171168
    %v1179 = vunpack.c.0.s8 %v1178
    %v1180 = vlaneseq
    %v1181 = vshrl.u32 %v1180, 7
    %v1182 = vsub.s32 %v1179, %v1181
    %v1183 = vrot.slane %v1173, %v1182
    %v1185 = vunpack.c.l.s4 1966171168
    %v1186 = vunpack.c.0.s8 %v1185
    %v1187 = vlaneseq
    %v1188 = vshrl.u32 %v1187, 7
    %v1189 = vsub.s32 %v1186, %v1188
    %v1190 = vrot.slane %v1174, %v1189
    %v1192 = vunpack.c.l.s4 1966171168
    %v1193 = vunpack.c.0.s8 %v1192
    %v1194 = vlaneseq
    %v1195 = vshrl.u32 %v1194, 7
    %v1196 = vsub.s32 %v1193, %v1195
    %v1197 = vrot.slane %v1175, %v1196
    %v1199 = vunpack.c.l.s4 1966171168
    %v1200 = vunpack.c.0.s8 %v1199
    %v1201 = vlaneseq
    %v1202 = vshrl.u32 %v1201, 7
    %v1203 = vsub.s32 %v1200, %v1202
    %v1204 = vrot.slane %v1176, %v1203
    %v1205 = vcombine.low %v1183, %v1197
    %v1206 = vcombine.low %v1190, %v1204
    %v1207 = vcombine.low %v1116, %v1132
    %v1208 = vcombine.low %v1139, %v1140
    %v1210 = vunpack.c.l.s4 1966171168
    %v1211 = vunpack.c.0.s8 %v1210
    %v1212 = vlaneseq
    %v1213 = vshrl.u32 %v1212, 7
    %v1214 = vsub.s32 %v1211, %v1213
    %v1215 = vrot.slane %v1207, %v1214
    %v1217 = vunpack.c.l.s4 1966171168
    %v1218 = vunpack.c.0.s8 %v1217
    %v1219 = vlaneseq
    %v1220 = vshrl.u32 %v1219, 7
    %v1221 = vsub.s32 %v1218, %v1220
    %v1222 = vrot.slane %v1208, %v1221
    %v1223 = vcombine.low %v1215, %v1222
    %v1224 = vcombine.high %v1215, %v1222
    %v1226 = vunpack.c.l.s4 1966171168
    %v1227 = vunpack.c.0.s8 %v1226
    %v1228 = vlaneseq
    %v1229 = vshrl.u32 %v1228, 7
    %v1230 = vsub.s32 %v1227, %v1229
    %v1231 = vrot.slane %v1223, %v1230
    %v1233 = vunpack.c.l.s4 1966171168
    %v1234 = vunpack.c.0.s8 %v1233
    %v1235 = vlaneseq
    %v1236 = vshrl.u32 %v1235, 7
    %v1237 = vsub.s32 %v1234, %v1236
    %v1238 = vrot.slane %v1224, %v1237
    %1239 = vrot.lane.b32.xlu0 %v1205, 96
    %v1240 = vpop.permute.xlu0 %1239
    %1241 = vrot.lane.b32.xlu0 %v1206, 96
    %v1242 = vpop.permute.xlu0 %1241
    %1243 = vrot.lane.b32.xlu0 %v1231, 96
    %v1244 = vpop.permute.xlu0 %1243
    %1245 = vrot.lane.b32.xlu0 %v1238, 96
    %v1246 = vpop.permute.xlu0 %1245
    %v1247 = vsel %vm433, %v1240, %v1242
    %v1248 = vsel %vm433, %v1244, %v1246
    %1251 = vst [vmem:[#allocation8 + $0x20] sm:$0xff] %v1247
    %1252 = vst [vmem:[#allocation8 + $0x60] sm:$0xf] %v1248
    %v1256 = vunpack.c.l.s4 1966171168
    %v1257 = vunpack.c.0.s8 %v1256
    %v1258 = vlaneseq
    %v1259 = vshrl.u32 %v1258, 7
    %v1260 = vsub.s32 %v1257, %v1259
    %v1261 = vrot.slane %v89, %v1260
    %v1263 = vunpack.c.l.s4 1966171168
    %v1264 = vunpack.c.0.s8 %v1263
    %v1265 = vlaneseq
    %v1266 = vshrl.u32 %v1265, 7
    %v1267 = vsub.s32 %v1264, %v1266
    %v1268 = vrot.slane %v90, %v1267
    %v1269 = vcombine.low %v1261, %v1268
    %v1270 = vcombine.high %v1261, %v1268
    %v1272 = vunpack.c.l.s4 1966171168
    %v1273 = vunpack.c.0.s8 %v1272
    %v1274 = vlaneseq
    %v1275 = vshrl.u32 %v1274, 7
    %v1276 = vsub.s32 %v1273, %v1275
    %v1277 = vrot.slane %v1269, %v1276
    %v1279 = vunpack.c.l.s4 1966171168
    %v1280 = vunpack.c.0.s8 %v1279
    %v1281 = vlaneseq
    %v1282 = vshrl.u32 %v1281, 7
    %v1283 = vsub.s32 %v1280, %v1282
    %v1284 = vrot.slane %v1270, %v1283
    %v1285 = vcombine.high %v1277, %v1277
    %v1286 = vcombine.low %v1277, %v1284
    %v1287 = vcombine.low %v1285, %v1277
    %v1288 = vcombine.low %v1284, %v1285
    %v1290 = vunpack.c.l.s4 1966171168
    %v1291 = vunpack.c.0.s8 %v1290
    %v1292 = vlaneseq
    %v1293 = vshrl.u32 %v1292, 7
    %v1294 = vsub.s32 %v1291, %v1293
    %v1295 = vrot.slane %v1286, %v1294
    %v1297 = vunpack.c.l.s4 1966171168
    %v1298 = vunpack.c.0.s8 %v1297
    %v1299 = vlaneseq
    %v1300 = vshrl.u32 %v1299, 7
    %v1301 = vsub.s32 %v1298, %v1300
    %v1302 = vrot.slane %v1287, %v1301
    %v1304 = vunpack.c.l.s4 1966171168
    %v1305 = vunpack.c.0.s8 %v1304
    %v1306 = vlaneseq
    %v1307 = vshrl.u32 %v1306, 7
    %v1308 = vsub.s32 %v1305, %v1307
    %v1309 = vrot.slane %v1288, %v1308
    %v1310 = vcombine.low %v1295, %v1302
    %v1311 = vcombine.high %v1295, %v1302
    %v1312 = vcombine.low %v1309, %v1295
    %v1313 = vcombine.high %v1309, %v1295
    %v1315 = vunpack.c.l.s4 1966171168
    %v1316 = vunpack.c.0.s8 %v1315
    %v1317 = vlaneseq
    %v1318 = vshrl.u32 %v1317, 7
    %v1319 = vsub.s32 %v1316, %v1318
    %v1320 = vrot.slane %v1310, %v1319
    %v1322 = vunpack.c.l.s4 1966171168
    %v1323 = vunpack.c.0.s8 %v1322
    %v1324 = vlaneseq
    %v1325 = vshrl.u32 %v1324, 7
    %v1326 = vsub.s32 %v1323, %v1325
    %v1327 = vrot.slane %v1311, %v1326
    %v1329 = vunpack.c.l.s4 1966171168
    %v1330 = vunpack.c.0.s8 %v1329
    %v1331 = vlaneseq
    %v1332 = vshrl.u32 %v1331, 7
    %v1333 = vsub.s32 %v1330, %v1332
    %v1334 = vrot.slane %v1312, %v1333
    %v1336 = vunpack.c.l.s4 1966171168
    %v1337 = vunpack.c.0.s8 %v1336
    %v1338 = vlaneseq
    %v1339 = vshrl.u32 %v1338, 7
    %v1340 = vsub.s32 %v1337, %v1339
    %v1341 = vrot.slane %v1313, %v1340
    %v1342 = vcombine.low %v1320, %v1334
    %v1343 = vcombine.high %v1320, %v1334
    %v1344 = vcombine.low %v1327, %v1341
    %v1345 = vcombine.low %v1302, %v1309
    %v1346 = vcombine.high %v1302, %v1309
    %v1348 = vunpack.c.l.s4 1966171168
    %v1349 = vunpack.c.0.s8 %v1348
    %v1350 = vlaneseq
    %v1351 = vshrl.u32 %v1350, 7
    %v1352 = vsub.s32 %v1349, %v1351
    %v1353 = vrot.slane %v1345, %v1352
    %v1355 = vunpack.c.l.s4 1966171168
    %v1356 = vunpack.c.0.s8 %v1355
    %v1357 = vlaneseq
    %v1358 = vshrl.u32 %v1357, 7
    %v1359 = vsub.s32 %v1356, %v1358
    %v1360 = vrot.slane %v1346, %v1359
    %v1361 = vcombine.high %v1353, %v1353
    %1368 = vst [vmem:[#allocation8 + $0x28] sm:$0xff] %v1342
    %1369 = vst [vmem:[#allocation8 + $0x30] sm:$0xff] %v1344
    %1370 = vst [vmem:[#allocation8 + $0x38] sm:$0xff] %v1343
    %1371 = vst [vmem:[#allocation8 + $0x68] sm:$0xf] %v1353
    %1372 = vst [vmem:[#allocation8 + $0x70] sm:$0xf] %v1360
    %1373 = vst [vmem:[#allocation8 + $0x78] sm:$0xf] %v1361
    // Predicated region
    $region26: #{tpu_custom_call.1} parent=1 // pred_check
      _
    $region27: #{tpu_custom_call.1} parent=1 // pred_check_branch
      %1375 = sbr.rel (0) target = $region29
    $region28: #{tpu_custom_call.1} parent=1 // pred_region
      %s1377 = ssub.s32 2048, 2048
      %1378 = vsyncadd [#allocation4], %s1377
      %s1379 = sshll.u32 [#allocation8], 4
      %s1380 = int_to_ptr.vmem [resolvable:$true] %s1379
      %1385 = dma.vmem_to_hbm [thread:$0]  %s1380, 2048, %s3, [#allocation4], 1024, 1024, 64
    $region29: #{tpu_custom_call.1} parent=1 // pred_fallthru
      _
    // Predicated region
    $region30: #{tpu_custom_call.1} parent=1 // pred_check
      _
    $region31: #{tpu_custom_call.1} parent=1 // pred_check_branch
      %1387 = sbr.rel (0) target = $region33
    $region32: #{tpu_custom_call.1} parent=1 // pred_region
      %1388 = dma.done [#allocation4], 2048
    $region33: #{tpu_custom_call.1} parent=1 // pred_fallthru
      _
    %1389 = vsyncpa [#allocation3], 1
    %1390 = vsyncpa [#allocation6], 1
    %1391 = vsyncpa [#allocation4], 1

</llo_original>
